<compile_context>
chip_gen: v7x
topology: tpu7x:2x2x1
jax: 0.10.0
libtpu: 0.0.40
codegen_flags: <defaults>
</compile_context>

<pallas_src>
import jax
import jax.numpy as jnp
from jax.experimental import pallas as pl
from jax.experimental.pallas import tpu as pltpu


def _cdiv(a, b):
    return -(-a // b)


def _vmem_capacity_bytes():
    """Device VMEM capacity (64 MiB v7x, 128 MiB v5e/v6e); conservative fallback."""
    try:
        info = pltpu.get_tpu_info()
        for name in ("vmem_capacity_bytes", "vmem_size_bytes", "vmem_bytes"):
            cap = getattr(info, name, None)
            if cap:
                return int(cap)
    except Exception:
        pass
    return 64 * 1024 * 1024  # v7x-sized fallback (safe everywhere)


def _plan_tiles(hw, n_imgs, per_col_bytes, budget_bytes, max_tile_hw=None,
                max_nblk=16):
    """Pick (nblk, tile_hw, n_hw).

    tile_hw is the full HW (single block per image) when it fits the budget,
    else a lane-dense multiple of 128 with a ragged (masked) tail.  When the
    whole HW fits in one block, nblk > 1 images are batched per grid step to
    amortize the per-step overhead.
    """
    cap = (budget_bytes // max(per_col_bytes, 1)) // 128 * 128
    cap = max(cap, 128)
    if max_tile_hw is not None:
        cap = max(128, min(cap, (max_tile_hw // 128) * 128))
    if hw <= cap:
        tile_hw, n_hw = hw, 1
        nblk = budget_bytes // max(per_col_bytes * hw, 1)
        nblk = int(max(1, min(nblk, n_imgs, max_nblk)))
    else:
        tile_hw, n_hw = cap, _cdiv(hw, cap)
        nblk = 1
    return nblk, tile_hw, n_hw


# ----------------------------------------------------------------------------
# Pass 1: conv + bias + ReLU6, accumulate per-image channel sum / sumsq over
# the HW tiles of this split (sequential "arbitrary" axis -> resident
# accumulator output block).  Optionally also emits y as bf16 (roundtrip path).
# ----------------------------------------------------------------------------
def _make_stats_kernel(nblk, hw, tile_hw, tps, need_mask, emit_y):
    def kernel(x_ref, w_ref, b_ref, *out_refs):
        if emit_y:
            sum_ref, sq_ref, y_ref = out_refs
        else:
            sum_ref, sq_ref = out_refs
        p = pl.program_id(1)   # HW-split index ("parallel", feeds 2nd TC on v7x)
        j = pl.program_id(2)   # tile within split ("arbitrary": accumulator)

        @pl.when(j == 0)
        def _():
            sum_ref[...] = jnp.zeros_like(sum_ref)
            sq_ref[...] = jnp.zeros_like(sq_ref)

        if need_mask:
            # Unclamped global start column of this tile; invalid lanes cover
            # both the ragged tail and fully-out-of-range overhang tiles.
            start = (p * tps + j) * tile_hw
            lane = jax.lax.broadcasted_iota(jnp.int32, (1, tile_hw), 1)
            valid = lane < (hw - start)

        w = w_ref[...]
        b = b_ref[...]
        for i in range(nblk):                                 # static unroll
            y = jnp.dot(w, x_ref[i], preferred_element_type=jnp.float32)
            y = jnp.clip(y + b, 0.0, 6.0)                     # bias + ReLU6
            if emit_y:
                y_ref[i] = y.astype(y_ref.dtype)              # OOB cols dropped
            ym = jnp.where(valid, y, 0.0) if need_mask else y
            sum_ref[i, 0] += jnp.sum(ym, axis=1, keepdims=True)   # (Cout, 1)
            sq_ref[i, 0] += jnp.sum(ym * ym, axis=1, keepdims=True)

    return kernel


# ----------------------------------------------------------------------------
# Pass 2 (recompute path): conv + bias + ReLU6 again, then BN as a single FMA
# with per-channel scale/shift precomputed in the wrapper.
# ----------------------------------------------------------------------------
def _make_apply_recompute_kernel(nblk):
    def kernel(x_ref, w_ref, b_ref, scale_ref, shift_ref, o_ref):
        w = w_ref[...]
        b = b_ref[...]
        scale = scale_ref[...]
        shift = shift_ref[...]
        for i in range(nblk):
            y = jnp.dot(w, x_ref[i], preferred_element_type=jnp.float32)
            y = jnp.clip(y + b, 0.0, 6.0)
            o_ref[i] = (y * scale + shift).astype(o_ref.dtype)

    return kernel


# ----------------------------------------------------------------------------
# Pass 2 (roundtrip path): pure elementwise BN FMA on the bf16 y from pass 1.
# ----------------------------------------------------------------------------
def _bn_apply_kernel(y_ref, scale_ref, shift_ref, o_ref):
    y = y_ref[...].astype(jnp.float32)
    o_ref[...] = (y * scale_ref[...] + shift_ref[...]).astype(o_ref.dtype)


def convblock_forward(x_nchw, w, b, gamma, beta, *, eps=1e-5, max_tile_hw=None):
    """x_nchw: (N, Cin, H, W) f32.  w: (Cout, Cin) f32 (1x1 conv weight
    squeezed).  b/gamma/beta: (Cout,) f32.  max_tile_hw is a test-only knob."""
    N, Cin, H, W = x_nchw.shape
    Cout = w.shape[0]
    HW = H * W

    x3 = x_nchw.reshape(N, Cin, HW)              # free view, no transpose
    b2 = b.reshape(Cout, 1)

    vmem_cap = _vmem_capacity_bytes()
    tile_budget = vmem_cap // 4                  # ~25% of VMEM for streamed tiles
    vmem_limit = int(vmem_cap * 0.6)

    # Strategy dispatch: write y (bf16) when that is cheaper than re-reading x
    # and redoing the matmul (projection layers Cout < Cin), or when the layer
    # is big enough that a second matmul would be MXU-bound (big expansions).
    use_roundtrip = (Cout < Cin) or (Cin >= 256 and Cout >= 512)

    # ------------------------------------------------------------------ pass 1
    # Per-lane-column f32-equivalent footprint per image: double-buffered x
    # columns + in-kernel f32 y / masked-y temps (+ double-buffered bf16 y out).
    p1_per_col = (2 * Cin + 3 * Cout) * 4 + (4 * Cout if use_roundtrip else 0)
    nblk1, tile1, n_hw1 = _plan_tiles(HW, N, p1_per_col, tile_budget, max_tile_hw)
    nib1 = _cdiv(N, nblk1)
    n_split = 2 if n_hw1 >= 2 else 1             # keep v7x's 2nd TC busy
    tps = _cdiv(n_hw1, n_split)                  # tiles per split
    need_mask = (n_split * tps * tile1 != HW)
    overhang = (n_split * tps != n_hw1)

    if overhang:
        def _hw_blk(p, j):
            # Clamp the out-of-range overhang tile back in bounds; its stats
            # contribution is fully masked and its (roundtrip) y write just
            # rewrites the last tile with identical values.
            return jnp.minimum(p * tps + j, n_hw1 - 1)
    else:
        def _hw_blk(p, j):
            return p * tps + j

    p1_in_specs = [
        pl.BlockSpec((nblk1, Cin, tile1), lambda n, p, j: (n, 0, _hw_blk(p, j))),
        pl.BlockSpec((Cout, Cin), lambda n, p, j: (0, 0)),
        pl.BlockSpec((Cout, 1), lambda n, p, j: (0, 0)),
    ]
    stat_shape = jax.ShapeDtypeStruct((N, n_split, Cout, 1), jnp.float32)
    stat_spec = pl.BlockSpec((nblk1, 1, Cout, 1), lambda n, p, j: (n, p, 0, 0))
    if use_roundtrip:
        p1_out_shape = (stat_shape, stat_shape,
                        jax.ShapeDtypeStruct((N, Cout, HW), jnp.bfloat16))
        p1_out_specs = (stat_spec, stat_spec,
                        pl.BlockSpec((nblk1, Cout, tile1),
                                     lambda n, p, j: (n, 0, _hw_blk(p, j))))
    else:
        p1_out_shape = (stat_shape, stat_shape)
        p1_out_specs = (stat_spec, stat_spec)

    p1_out = pl.pallas_call(
        _make_stats_kernel(nblk1, HW, tile1, tps, need_mask, use_roundtrip),
        out_shape=p1_out_shape,
        grid_spec=pltpu.PrefetchScalarGridSpec(
            num_scalar_prefetch=0,
            grid=(nib1, n_split, tps),
            in_specs=p1_in_specs,
            out_specs=p1_out_specs,
        ),
        compiler_params=pltpu.CompilerParams(
            # image blocks and HW-splits are independent ("parallel" -> can be
            # sharded across v7x's two TensorCores); the tile axis within a
            # split carries the += accumulator and must stay sequential.
            dimension_semantics=("parallel", "parallel", "arbitrary"),
            vmem_limit_bytes=vmem_limit,
        ),
    )(x3, w, b2)

    if use_roundtrip:
        sums, sqs, y_bf16 = p1_out
    else:
        sums, sqs = p1_out

    # ---- tiny XLA glue: fold partials into per-channel scale / shift --------
    m_total = jnp.float32(N * HW)
    mean = jnp.sum(sums, axis=(0, 1))[:, 0] / m_total
    var = jnp.sum(sqs, axis=(0, 1))[:, 0] / m_total - mean * mean  # biased (train BN)
    scale = gamma * jax.lax.rsqrt(var + eps)
    shift = beta - mean * scale
    scale2 = scale.reshape(Cout, 1)
    shift2 = shift.reshape(Cout, 1)

    # ------------------------------------------------------------------ pass 2
    if use_roundtrip:
        p2_per_col = 16 * Cout   # bf16 y in (x2 buf) + f32 cast + f32 out (x2 buf)
        nblk2, tile2, n_hw2 = _plan_tiles(HW, N, p2_per_col, tile_budget, max_tile_hw)
        nib2 = _cdiv(N, nblk2)
        out3 = pl.pallas_call(
            _bn_apply_kernel,
            out_shape=jax.ShapeDtypeStruct((N, Cout, HW), jnp.float32),
            grid_spec=pltpu.PrefetchScalarGridSpec(
                num_scalar_prefetch=0,
                grid=(nib2, n_hw2),
                in_specs=[
                    pl.BlockSpec((nblk2, Cout, tile2), lambda n, j: (n, 0, j)),
                    pl.BlockSpec((Cout, 1), lambda n, j: (0, 0)),
                    pl.BlockSpec((Cout, 1), lambda n, j: (0, 0)),
                ],
                out_specs=pl.BlockSpec((nblk2, Cout, tile2),
                                       lambda n, j: (n, 0, j)),
            ),
            compiler_params=pltpu.CompilerParams(
                dimension_semantics=("parallel", "parallel"),
                vmem_limit_bytes=vmem_limit,
            ),
        )(y_bf16, scale2, shift2)
    else:
        p2_per_col = (2 * Cin + 4 * Cout) * 4
        nblk2, tile2, n_hw2 = _plan_tiles(HW, N, p2_per_col, tile_budget, max_tile_hw)
        nib2 = _cdiv(N, nblk2)
        out3 = pl.pallas_call(
            _make_apply_recompute_kernel(nblk2),
            out_shape=jax.ShapeDtypeStruct((N, Cout, HW), jnp.float32),
            grid_spec=pltpu.PrefetchScalarGridSpec(
                num_scalar_prefetch=0,
                grid=(nib2, n_hw2),
                in_specs=[
                    pl.BlockSpec((nblk2, Cin, tile2), lambda n, j: (n, 0, j)),
                    pl.BlockSpec((Cout, Cin), lambda n, j: (0, 0)),
                    pl.BlockSpec((Cout, 1), lambda n, j: (0, 0)),
                    pl.BlockSpec((Cout, 1), lambda n, j: (0, 0)),
                    pl.BlockSpec((Cout, 1), lambda n, j: (0, 0)),
                ],
                out_specs=pl.BlockSpec((nblk2, Cout, tile2),
                                       lambda n, j: (n, 0, j)),
            ),
            compiler_params=pltpu.CompilerParams(
                dimension_semantics=("parallel", "parallel"),
                vmem_limit_bytes=vmem_limit,
            ),
        )(x3, w, b2, scale2, shift2)

    return out3.reshape(N, Cout, H, W)           # free view, no transpose


def _reference(x, w, b, gamma, beta, eps=1e-5, quantize_y=False):
    # Pure-JAX reference with identical semantics (validation only).
    y = jnp.einsum("oc,nchw->nohw", w, x) + b[None, :, None, None]
    y = jnp.clip(y, 0.0, 6.0)
    mean = jnp.mean(y, axis=(0, 2, 3), keepdims=True)
    var = jnp.mean((y - mean) ** 2, axis=(0, 2, 3), keepdims=True)  # biased
    scale = gamma[None, :, None, None] * jax.lax.rsqrt(var + eps)
    shift = beta[None, :, None, None] - mean * scale
    if quantize_y:   # mirrors the bf16 y round-trip path (stats stay f32)
        y = y.astype(jnp.bfloat16).astype(jnp.float32)
    return y * scale + shift


if __name__ == "__main__":
    key = jax.random.PRNGKey(0)

    def _make_case(k, N, Cin, Cout, H):
        k_x, k_w, k_b, k_g, k_bt = jax.random.split(k, 5)
        x = jax.random.normal(k_x, (N, Cin, H, H), dtype=jnp.float32)
        # Conv2d weight (Cout, Cin, 1, 1) -> (Cout, Cin) matrix.
        w4 = jax.random.normal(k_w, (Cout, Cin, 1, 1), dtype=jnp.float32) * 0.1
        b = jax.random.normal(k_b, (Cout,), dtype=jnp.float32) * 0.1
        gamma = 1.0 + 0.1 * jax.random.normal(k_g, (Cout,), dtype=jnp.float32)
        beta = 0.1 * jax.random.normal(k_bt, (Cout,), dtype=jnp.float32)
        return x, w4[:, :, 0, 0], b, gamma, beta

    k1, k2, k3 = jax.random.split(key, 3)

    # (a) default small case: single full-HW tile, Nblk=2 images per grid step.
    x, w, b, g, bt = _make_case(k1, N=2, Cin=4, Cout=8, H=16)
    out = jax.block_until_ready(convblock_forward(x, w, b, g, bt))
    assert out.shape == (2, 8, 16, 16)
    assert jnp.allclose(out, _reference(x, w, b, g, bt), atol=2e-3, rtol=2e-3)

    # (b) ragged lane-dense tiling + split pass-1 reduction: HW=324, tile=128,
    #     3 tiles -> 2 "parallel" halves with a clamped + fully-masked overhang.
    x, w, b, g, bt = _make_case(k2, N=2, Cin=4, Cout=8, H=18)
    out = jax.block_until_ready(
        convblock_forward(x, w, b, g, bt, max_tile_hw=128))
    assert jnp.allclose(out, _reference(x, w, b, g, bt), atol=2e-3, rtol=2e-3)

    # (c) projection-shaped layer (Cout < Cin) -> bf16 y round-trip path.
    x, w, b, g, bt = _make_case(k3, N=2, Cin=16, Cout=8, H=18)
    out = jax.block_until_ready(
        convblock_forward(x, w, b, g, bt, max_tile_hw=128))
    ref = _reference(x, w, b, g, bt, quantize_y=True)
    assert jnp.allclose(out, ref, atol=5e-3, rtol=5e-3)

    print("KERNEL_OK")
</pallas_src>

<mosaic_0001>
module attributes {stable_mosaic.version = 11 : i64} {
  func.func @kernel(%arg0: i32, %arg1: i32, %arg2: i32, %arg3: memref<2x4x256xf32, #tpu.memory_space<vmem>>, %arg4: memref<8x4xf32, #tpu.memory_space<vmem>>, %arg5: memref<8x1xf32, #tpu.memory_space<vmem>>, %arg6: memref<2x1x8x1xf32, #tpu.memory_space<vmem>>, %arg7: memref<2x1x8x1xf32, #tpu.memory_space<vmem>>) attributes {dimension_semantics = [#tpu.dimension_semantics<parallel>, #tpu.dimension_semantics<parallel>, #tpu.dimension_semantics<arbitrary>], iteration_bounds = array<i64: 1, 1, 1>, scalar_prefetch = 0 : i64, scratch_operands = 0 : i64, tpu.core_type = #tpu.core_type<tc>, window_params = [{transform_indices = @transform_0, window_bounds = array<i64: 2, 4, 256>}, {pipeline_mode = #tpu.pipeline_mode<synchronous>, transform_indices = @transform_1, window_bounds = array<i64: 8, 4>}, {pipeline_mode = #tpu.pipeline_mode<synchronous>, transform_indices = @transform_2, window_bounds = array<i64: 8, 1>}, {transform_indices = @transform_3, window_bounds = array<i64: 2, 1, 8, 1>}, {transform_indices = @transform_4, window_bounds = array<i64: 2, 1, 8, 1>}]} {
    %c0_i32 = arith.constant 0 : i32
    %0 = arith.cmpi eq, %arg2, %c0_i32 : i32
    %1 = arith.extui %0 : i1 to i32
    %c0_i32_0 = arith.constant 0 : i32
    %2 = arith.cmpi ne, %1, %c0_i32_0 : i32
    scf.if %2 {
      %cst_50 = arith.constant 0.000000e+00 : f32
      %57 = vector.broadcast %cst_50 : f32 to vector<2x1x8x1xf32>
      %c0_51 = arith.constant 0 : index
      %c0_52 = arith.constant 0 : index
      %c0_53 = arith.constant 0 : index
      %c0_54 = arith.constant 0 : index
      %58 = vector.load %arg6[%c0_51, %c0_52, %c0_53, %c0_54] : memref<2x1x8x1xf32, #tpu.memory_space<vmem>>, vector<2x1x8x1xf32>
      tpu.vector_store %arg6[%c0_51, %c0_52, %c0_53, %c0_54], %57 {strides = array<i32>} : memref<2x1x8x1xf32, #tpu.memory_space<vmem>>, vector<2x1x8x1xf32>,
      %cst_55 = arith.constant 0.000000e+00 : f32
      %59 = vector.broadcast %cst_55 : f32 to vector<2x1x8x1xf32>
      %c0_56 = arith.constant 0 : index
      %c0_57 = arith.constant 0 : index
      %c0_58 = arith.constant 0 : index
      %c0_59 = arith.constant 0 : index
      %60 = vector.load %arg7[%c0_56, %c0_57, %c0_58, %c0_59] : memref<2x1x8x1xf32, #tpu.memory_space<vmem>>, vector<2x1x8x1xf32>
      tpu.vector_store %arg7[%c0_56, %c0_57, %c0_58, %c0_59], %59 {strides = array<i32>} : memref<2x1x8x1xf32, #tpu.memory_space<vmem>>, vector<2x1x8x1xf32>,
    } else {
    }
    %c0 = arith.constant 0 : index
    %c0_1 = arith.constant 0 : index
    %3 = vector.load %arg4[%c0, %c0_1] : memref<8x4xf32, #tpu.memory_space<vmem>>, vector<8x4xf32>
    %c0_2 = arith.constant 0 : index
    %c0_3 = arith.constant 0 : index
    %4 = vector.load %arg5[%c0_2, %c0_3] : memref<8x1xf32, #tpu.memory_space<vmem>>, vector<8x1xf32>
    %c0_4 = arith.constant 0 : index
    %c0_5 = arith.constant 0 : index
    %c0_6 = arith.constant 0 : index
    %5 = vector.load %arg3[%c0_4, %c0_5, %c0_6] : memref<2x4x256xf32, #tpu.memory_space<vmem>>, vector<1x4x256xf32>
    %6 = vector.shape_cast %5 : vector<1x4x256xf32> to vector<4x256xf32>
    %cst = arith.constant dense<0.000000e+00> : vector<8x256xf32>
    %7 = tpu.matmul %3, %6, %cst {dimension_numbers = #tpu.dot_dimension_numbers<[1], [0], [0], [1], [0, 0, 1, 1], [], []>} : vector<8x4xf32>, vector<4x256xf32>, vector<8x256xf32> -> vector<8x256xf32>
    %8 = vector.broadcast %4 : vector<8x1xf32> to vector<8x256xf32>
    %9 = arith.addf %7, %8 : vector<8x256xf32>
    %cst_7 = arith.constant 0.000000e+00 : f32
    %cst_8 = arith.constant 6.000000e+00 : f32
    %10 = vector.broadcast %cst_7 : f32 to vector<8x256xf32>
    %11 = arith.maximumf %10, %9 : vector<8x256xf32>
    %12 = vector.broadcast %cst_8 : f32 to vector<8x256xf32>
    %13 = arith.minimumf %12, %11 : vector<8x256xf32>
    %c0_9 = arith.constant 0 : index
    %c0_10 = arith.constant 0 : index
    %c0_11 = arith.constant 0 : index
    %c0_12 = arith.constant 0 : index
    %14 = vector.load %arg6[%c0_9, %c0_10, %c0_11, %c0_12] : memref<2x1x8x1xf32, #tpu.memory_space<vmem>>, vector<1x1x8x1xf32>
    %15 = vector.shape_cast %14 : vector<1x1x8x1xf32> to vector<8x1xf32>
    %cst_13 = arith.constant dense<0.000000e+00> : vector<8xf32>
    %16 = vector.multi_reduction <add>, %13, %cst_13 [1] : vector<8x256xf32> to vector<8xf32>
    %17 = vector.shape_cast %16 : vector<8xf32> to vector<8x1xf32>
    %18 = arith.addf %15, %17 : vector<8x1xf32>
    %c0_14 = arith.constant 0 : index
    %c0_15 = arith.constant 0 : index
    %c0_16 = arith.constant 0 : index
    %c0_17 = arith.constant 0 : index
    %19 = vector.load %arg6[%c0_14, %c0_15, %c0_16, %c0_17] : memref<2x1x8x1xf32, #tpu.memory_space<vmem>>, vector<1x1x8x1xf32>
    %20 = vector.shape_cast %19 : vector<1x1x8x1xf32> to vector<8x1xf32>
    %21 = vector.shape_cast %18 : vector<8x1xf32> to vector<1x1x8x1xf32>
    tpu.vector_store %arg6[%c0_14, %c0_15, %c0_16, %c0_17], %21 {strides = array<i32>} : memref<2x1x8x1xf32, #tpu.memory_space<vmem>>, vector<1x1x8x1xf32>,
    %c0_18 = arith.constant 0 : index
    %c0_19 = arith.constant 0 : index
    %c0_20 = arith.constant 0 : index
    %c0_21 = arith.constant 0 : index
    %22 = vector.load %arg7[%c0_18, %c0_19, %c0_20, %c0_21] : memref<2x1x8x1xf32, #tpu.memory_space<vmem>>, vector<1x1x8x1xf32>
    %23 = vector.shape_cast %22 : vector<1x1x8x1xf32> to vector<8x1xf32>
    %24 = arith.mulf %13, %13 : vector<8x256xf32>
    %cst_22 = arith.constant dense<0.000000e+00> : vector<8xf32>
    %25 = vector.multi_reduction <add>, %24, %cst_22 [1] : vector<8x256xf32> to vector<8xf32>
    %26 = vector.shape_cast %25 : vector<8xf32> to vector<8x1xf32>
    %27 = arith.addf %23, %26 : vector<8x1xf32>
    %c0_23 = arith.constant 0 : index
    %c0_24 = arith.constant 0 : index
    %c0_25 = arith.constant 0 : index
    %c0_26 = arith.constant 0 : index
    %28 = vector.load %arg7[%c0_23, %c0_24, %c0_25, %c0_26] : memref<2x1x8x1xf32, #tpu.memory_space<vmem>>, vector<1x1x8x1xf32>
    %29 = vector.shape_cast %28 : vector<1x1x8x1xf32> to vector<8x1xf32>
    %30 = vector.shape_cast %27 : vector<8x1xf32> to vector<1x1x8x1xf32>
    tpu.vector_store %arg7[%c0_23, %c0_24, %c0_25, %c0_26], %30 {strides = array<i32>} : memref<2x1x8x1xf32, #tpu.memory_space<vmem>>, vector<1x1x8x1xf32>,
    %c1 = arith.constant 1 : index
    %c0_27 = arith.constant 0 : index
    %c0_28 = arith.constant 0 : index
    %31 = vector.load %arg3[%c1, %c0_27, %c0_28] : memref<2x4x256xf32, #tpu.memory_space<vmem>>, vector<1x4x256xf32>
    %32 = vector.shape_cast %31 : vector<1x4x256xf32> to vector<4x256xf32>
    %cst_29 = arith.constant dense<0.000000e+00> : vector<8x256xf32>
    %33 = tpu.matmul %3, %32, %cst_29 {dimension_numbers = #tpu.dot_dimension_numbers<[1], [0], [0], [1], [0, 0, 1, 1], [], []>} : vector<8x4xf32>, vector<4x256xf32>, vector<8x256xf32> -> vector<8x256xf32>
    %34 = vector.broadcast %4 : vector<8x1xf32> to vector<8x256xf32>
    %35 = arith.addf %33, %34 : vector<8x256xf32>
    %cst_30 = arith.constant 0.000000e+00 : f32
    %cst_31 = arith.constant 6.000000e+00 : f32
    %36 = vector.broadcast %cst_30 : f32 to vector<8x256xf32>
    %37 = arith.maximumf %36, %35 : vector<8x256xf32>
    %38 = vector.broadcast %cst_31 : f32 to vector<8x256xf32>
    %39 = arith.minimumf %38, %37 : vector<8x256xf32>
    %c1_32 = arith.constant 1 : index
    %c0_33 = arith.constant 0 : index
    %c0_34 = arith.constant 0 : index
    %c0_35 = arith.constant 0 : index
    %40 = vector.load %arg6[%c1_32, %c0_33, %c0_34, %c0_35] : memref<2x1x8x1xf32, #tpu.memory_space<vmem>>, vector<1x1x8x1xf32>
    %41 = vector.shape_cast %40 : vector<1x1x8x1xf32> to vector<8x1xf32>
    %cst_36 = arith.constant dense<0.000000e+00> : vector<8xf32>
    %42 = vector.multi_reduction <add>, %39, %cst_36 [1] : vector<8x256xf32> to vector<8xf32>
    %43 = vector.shape_cast %42 : vector<8xf32> to vector<8x1xf32>
    %44 = arith.addf %41, %43 : vector<8x1xf32>
    %c1_37 = arith.constant 1 : index
    %c0_38 = arith.constant 0 : index
    %c0_39 = arith.constant 0 : index
    %c0_40 = arith.constant 0 : index
    %45 = vector.load %arg6[%c1_37, %c0_38, %c0_39, %c0_40] : memref<2x1x8x1xf32, #tpu.memory_space<vmem>>, vector<1x1x8x1xf32>
    %46 = vector.shape_cast %45 : vector<1x1x8x1xf32> to vector<8x1xf32>
    %47 = vector.shape_cast %44 : vector<8x1xf32> to vector<1x1x8x1xf32>
    tpu.vector_store %arg6[%c1_37, %c0_38, %c0_39, %c0_40], %47 {strides = array<i32>} : memref<2x1x8x1xf32, #tpu.memory_space<vmem>>, vector<1x1x8x1xf32>,
    %c1_41 = arith.constant 1 : index
    %c0_42 = arith.constant 0 : index
    %c0_43 = arith.constant 0 : index
    %c0_44 = arith.constant 0 : index
    %48 = vector.load %arg7[%c1_41, %c0_42, %c0_43, %c0_44] : memref<2x1x8x1xf32, #tpu.memory_space<vmem>>, vector<1x1x8x1xf32>
    %49 = vector.shape_cast %48 : vector<1x1x8x1xf32> to vector<8x1xf32>
    %50 = arith.mulf %39, %39 : vector<8x256xf32>
    %cst_45 = arith.constant dense<0.000000e+00> : vector<8xf32>
    %51 = vector.multi_reduction <add>, %50, %cst_45 [1] : vector<8x256xf32> to vector<8xf32>
    %52 = vector.shape_cast %51 : vector<8xf32> to vector<8x1xf32>
    %53 = arith.addf %49, %52 : vector<8x1xf32>
    %c1_46 = arith.constant 1 : index
    %c0_47 = arith.constant 0 : index
    %c0_48 = arith.constant 0 : index
    %c0_49 = arith.constant 0 : index
    %54 = vector.load %arg7[%c1_46, %c0_47, %c0_48, %c0_49] : memref<2x1x8x1xf32, #tpu.memory_space<vmem>>, vector<1x1x8x1xf32>
    %55 = vector.shape_cast %54 : vector<1x1x8x1xf32> to vector<8x1xf32>
    %56 = vector.shape_cast %53 : vector<8x1xf32> to vector<1x1x8x1xf32>
    tpu.vector_store %arg7[%c1_46, %c0_47, %c0_48, %c0_49], %56 {strides = array<i32>} : memref<2x1x8x1xf32, #tpu.memory_space<vmem>>, vector<1x1x8x1xf32>,
    return
  }
  func.func @transform_0(%arg0: i32, %arg1: i32, %arg2: i32) -> (i32, i32, i32) {
    %c1_i32 = arith.constant 1 : i32
    %0 = arith.muli %arg1, %c1_i32 : i32
    %1 = arith.addi %0, %arg2 : i32
    %c0_i32 = arith.constant 0 : i32
    %c0_i32_0 = arith.constant 0 : i32
    return %arg0, %c0_i32, %1 : i32, i32, i32
  }
  func.func @transform_1(%arg0: i32, %arg1: i32, %arg2: i32) -> (i32, i32) {
    %c0_i32 = arith.constant 0 : i32
    %c0_i32_0 = arith.constant 0 : i32
    %c0_i32_1 = arith.constant 0 : i32
    return %c0_i32, %c0_i32_0 : i32, i32
  }
  func.func @transform_2(%arg0: i32, %arg1: i32, %arg2: i32) -> (i32, i32) {
    %c0_i32 = arith.constant 0 : i32
    %c0_i32_0 = arith.constant 0 : i32
    %c0_i32_1 = arith.constant 0 : i32
    return %c0_i32, %c0_i32_0 : i32, i32
  }
  func.func @transform_3(%arg0: i32, %arg1: i32, %arg2: i32) -> (i32, i32, i32, i32) {
    %c0_i32 = arith.constant 0 : i32
    %c0_i32_0 = arith.constant 0 : i32
    %c0_i32_1 = arith.constant 0 : i32
    return %arg0, %arg1, %c0_i32, %c0_i32_0 : i32, i32, i32, i32
  }
  func.func @transform_4(%arg0: i32, %arg1: i32, %arg2: i32) -> (i32, i32, i32, i32) {
    %c0_i32 = arith.constant 0 : i32
    %c0_i32_0 = arith.constant 0 : i32
    %c0_i32_1 = arith.constant 0 : i32
    return %arg0, %arg1, %c0_i32, %c0_i32_0 : i32, i32, i32, i32
  }
}

</mosaic_0001>

<llo_original>
// kernel: tpu_custom_call.1
$region0: #{tpu_custom_call.1}
  #allocation0 [shape = 'u32[]', space=smem, size = 0x4, offset = 0x4, fixed_abs, tag = 'smem constant byte address 0x4 - core index']
  #allocation1 [shape = 'u32[144,128]{1,0:T(1,128)}', space=vmem, size = 0x12000, scoped, tag = 'internal scratch']
  %s0 = inlined_call_operand.vmem [shape: f32[2,4,256], index: 0, kind: input, shape index: {}]
  %s1 = inlined_call_operand.vmem [shape: f32[8,4], index: 1, kind: input, shape index: {}]
  %s2 = inlined_call_operand.vmem [shape: f32[8,1], index: 2, kind: input, shape index: {}]
  %s3 = inlined_call_operand.vmem [shape: f32[2,1,8,1], index: 3, kind: output, shape index: {0}]
  %s4 = inlined_call_operand.vmem [shape: f32[2,1,8,1], index: 4, kind: output, shape index: {1}]
  %5 = xla_tuple %s3, %s4
  %s6 = sld [smem:[#allocation0]]
  $region34: #{tpu_custom_call.1} parent=0
    _
  %s8 = ssub.s32 1, %s6
  %s9 = scalar_select 0, %s8, %s6
  // Predicated region
  $region2: #{tpu_custom_call.1} parent=0 // pred_check
    _
  $region3: #{tpu_custom_call.1} parent=0 // pred_check_branch
    %11 = sbr.rel (0) target = $region5
  $region4: #{tpu_custom_call.1} parent=0 // pred_region
    %s12 = sadd.s32 0, 0
    %s13 = smul.u32 2, %s12
    %p14 = scmp.lt.s32.totalorder %s13, 1
    %s15 = scalar_select %p14, %s13, 1
    %s16 = smul.addr %s15, 4
    %s17 = scalar_lea.vmem %s0, %s16
    %s18 = sadd.s32 0, 0
    %s19 = smul.u32 2, %s18
  $region5: #{tpu_custom_call.1} parent=0 // pred_fallthru
    _
  // Predicated region
  $region6: #{tpu_custom_call.1} parent=0 // pred_check
    _
  $region7: #{tpu_custom_call.1} parent=0 // pred_check_branch
    %21 = sbr.rel (0) target = $region9
  $region8: #{tpu_custom_call.1} parent=0 // pred_region
    _
  $region9: #{tpu_custom_call.1} parent=0 // pred_fallthru
    _
  // Predicated region
  $region10: #{tpu_custom_call.1} parent=0 // pred_check
    _
  $region11: #{tpu_custom_call.1} parent=0 // pred_check_branch
    %23 = sbr.rel (0) target = $region13
  $region12: #{tpu_custom_call.1} parent=0 // pred_region
    _
  $region13: #{tpu_custom_call.1} parent=0 // pred_fallthru
    _
  %s24 = sadd.s32 0, 0
  %s25 = smul.u32 2, %s24
  %p26 = scmp.lt.s32.totalorder %s25, 1
  %s27 = scalar_select %p26, %s25, 1
  %s28 = smul.addr %s27, 4
  %s29 = scalar_lea.vmem %s0, %s28
  %s30 = sadd.s32 0, 0
  %s31 = smul.u32 2, %s30
  %p32 = scmp.lt.s32.totalorder %s31, 1
  %s33 = scalar_select %p32, %s31, 1
  %s34 = smul.addr %s33, 4
  %s35 = scalar_lea.vmem %s0, %s34
  %s36 = sadd.s32 0, 0
  %s37 = smul.u32 2, %s36
  %p38 = scmp.eq.s32.totalorder 0, 0
  // Predicated region
  $region14: #{tpu_custom_call.1} parent=0 // pred_check
    %p39 = pneg %p38
  $region15: #{tpu_custom_call.1} parent=0 // pred_check_branch
    %41 = sbr.rel (%p39) target = $region17
  $region16: #{tpu_custom_call.1} parent=0 // pred_region
    %vm42 = vcmask 7168
    %43 = vst.msk [vmem:[%s3] sm:$0xff] %vm42, 0.0
    %44 = vst.msk [vmem:[%s3 + $0x8] sm:$0xff] %vm42, 0.0
    %45 = vst.msk [vmem:[%s4] sm:$0xff] %vm42, 0.0
    %46 = vst.msk [vmem:[%s4 + $0x8] sm:$0xff] %vm42, 0.0
  $region17: #{tpu_custom_call.1} parent=0 // pred_fallthru
    _
  %v47 = vld [vmem:[%s1] sm:$0xff]
  %v48 = vld [vmem:[%s2] sm:$0xff]
  %v49 = vld [vmem:[%s35] sm:$0xff]
  %51 = vset.pattern.permute.xlu0 0
  %52 = vperm.xlu0 %51, %v48
  %v53 = vpop.permute.xlu0 %52
  %v56 = vcombine.high %v49, %v49
  %vm57 = vcmask 31744
  %v59 = vsel %vm57, %v47, 0
  %vm61 = vcmask 1043456
  %v62 = vsel %vm61, %v49, 0
  %v64 = vsel %vm61, %v56, 0
  %66 = vmatprep.subr.mxu0 %v64
  %67 = vmatpush1.msra.mxu0 %v62
  %68 = vmatprep.subr.mxu0 0.0
  %69 = vmatpush1.msra.mxu0 0.0
  %70 = vmatprep.subr.mxu0 0.0
  %71 = vmatpush1.msra.mxu0 0.0
  %72 = vmatprep.subr.mxu0 0.0
  %73 = vmatpush1.msra.mxu0 0.0
  %74 = vmatprep.subr.mxu0 0.0
  %75 = vmatpush1.msra.mxu0 0.0
  %76 = vmatprep.subr.mxu0 0.0
  %77 = vmatpush1.msra.mxu0 0.0
  %78 = vmatprep.subr.mxu0 0.0
  %79 = vmatpush1.msra.mxu0 0.0
  %80 = vmatprep.subr.mxu0 0.0
  %81 = vmatpush1.msra.mxu0 0.0
  %82 = vmatprep.subr.mxu0 0.0
  %83 = vmatpush1.msra.mxu0 0.0
  %84 = vmatprep.subr.mxu0 0.0
  %85 = vmatpush1.msra.mxu0 0.0
  %86 = vmatprep.subr.mxu0 0.0
  %87 = vmatpush1.msra.mxu0 0.0
  %88 = vmatprep.subr.mxu0 0.0
  %89 = vmatpush1.msra.mxu0 0.0
  %90 = vmatprep.subr.mxu0 0.0
  %91 = vmatpush1.msra.mxu0 0.0
  %92 = vmatprep.subr.mxu0 0.0
  %93 = vmatpush1.msra.mxu0 0.0
  %94 = vmatprep.subr.mxu0 0.0
  %95 = vmatpush1.msra.mxu0 0.0
  %96 = vmatprep.subr.mxu0 0.0
  %97 = vmatpush1.msra.mxu0 0.0
  %98 = vmatprep.subr.mxu0 0.0
  %99 = vmatpush1.msra.mxu0 0.0
  %100 = vmatprep.subr.mxu0 0.0
  %101 = vmatpush1.msra.mxu0 0.0
  %102 = vmatprep.subr.mxu0 0.0
  %103 = vmatpush1.msra.mxu0 0.0
  %104 = vmatprep.subr.mxu0 0.0
  %105 = vmatpush1.msra.mxu0 0.0
  %106 = vmatprep.subr.mxu0 0.0
  %107 = vmatpush1.msra.mxu0 0.0
  %108 = vmatprep.subr.mxu0 0.0
  %109 = vmatpush1.msra.mxu0 0.0
  %110 = vmatprep.subr.mxu0 0.0
  %111 = vmatpush1.msra.mxu0 0.0
  %112 = vmatprep.subr.mxu0 0.0
  %113 = vmatpush1.msra.mxu0 0.0
  %114 = vmatprep.subr.mxu0 0.0
  %115 = vmatpush1.msra.mxu0 0.0
  %116 = vmatprep.subr.mxu0 0.0
  %117 = vmatpush1.msra.mxu0 0.0
  %118 = vmatprep.subr.mxu0 0.0
  %119 = vmatpush1.msra.mxu0 0.0
  %120 = vmatprep.subr.mxu0 0.0
  %121 = vmatpush1.msra.mxu0 0.0
  %122 = vmatprep.subr.mxu0 0.0
  %123 = vmatpush1.msra.mxu0 0.0
  %124 = vmatprep.subr.mxu0 0.0
  %125 = vmatpush1.msra.mxu0 0.0
  %126 = vmatprep.subr.mxu0 0.0
  %127 = vmatpush1.msra.mxu0 0.0
  %128 = vmatprep.subr.mxu0 0.0
  %129 = vmatpush1.msra.mxu0 0.0
  %130 = vmatprep.mubr.f32.mxu0 0.0
  %131 = vmatmul.mubr.f32.gmra.mrb[0].mxu0 %v59
  %v132 = vpop.f32.mrb[0].mxu0
  %v133 = vadd.f32 %v53, %v132
  %v134 = vpop.f32.mrb[0].mxu0
  %v135 = vadd.f32 %v53, %v134
  %136 = vdwg.mxu0
  %v137 = vmax.f32 %v133, 0.0
  %v138 = vmax.f32 %v135, 0.0
  %v139 = vmin.f32 %v137, 6.0
  %v140 = vmin.f32 %v138, 6.0
  %v141 = vld [vmem:[%s3] sm:$0xff]
  %v142 = vadd.f32 %v139, %v140
  %143 = vadd.xlane.f32.xlu0 %v142
  %v144 = vpop.xlane.xlu0 %143
  %v145 = vadd.f32 %v141, %v144
  %vm146 = vcmask 7168
  %147 = vst.msk [vmem:[%s3] sm:$0xff] %vm146, %v145
  %v148 = vld [vmem:[%s4] sm:$0xff]
  %v149 = vmul.f32 %v139, %v139
  %v150 = vmul.f32 %v140, %v140
  %v151 = vadd.f32 %v149, %v150
  %152 = vadd.xlane.f32.xlu0 %v151
  %v153 = vpop.xlane.xlu0 %152
  %v154 = vadd.f32 %v148, %v153
  %155 = vst.msk [vmem:[%s4] sm:$0xff] %vm146, %v154
  %s156 = scalar_lea.vmem %s35, 8
  %v157 = vld [vmem:[%s156] sm:$0xff]
  %v159 = vcombine.high %v157, %v157
  %v160 = vsel %vm61, %v157, 0
  %v162 = vsel %vm61, %v159, 0
  %164 = vmatprep.subr.mxu0 %v162
  %165 = vmatpush1.msra.mxu0 %v160
  %166 = vmatprep.subr.mxu0 0.0
  %167 = vmatpush1.msra.mxu0 0.0
  %168 = vmatprep.subr.mxu0 0.0
  %169 = vmatpush1.msra.mxu0 0.0
  %170 = vmatprep.subr.mxu0 0.0
  %171 = vmatpush1.msra.mxu0 0.0
  %172 = vmatprep.subr.mxu0 0.0
  %173 = vmatpush1.msra.mxu0 0.0
  %174 = vmatprep.subr.mxu0 0.0
  %175 = vmatpush1.msra.mxu0 0.0
  %176 = vmatprep.subr.mxu0 0.0
  %177 = vmatpush1.msra.mxu0 0.0
  %178 = vmatprep.subr.mxu0 0.0
  %179 = vmatpush1.msra.mxu0 0.0
  %180 = vmatprep.subr.mxu0 0.0
  %181 = vmatpush1.msra.mxu0 0.0
  %182 = vmatprep.subr.mxu0 0.0
  %183 = vmatpush1.msra.mxu0 0.0
  %184 = vmatprep.subr.mxu0 0.0
  %185 = vmatpush1.msra.mxu0 0.0
  %186 = vmatprep.subr.mxu0 0.0
  %187 = vmatpush1.msra.mxu0 0.0
  %188 = vmatprep.subr.mxu0 0.0
  %189 = vmatpush1.msra.mxu0 0.0
  %190 = vmatprep.subr.mxu0 0.0
  %191 = vmatpush1.msra.mxu0 0.0
  %192 = vmatprep.subr.mxu0 0.0
  %193 = vmatpush1.msra.mxu0 0.0
  %194 = vmatprep.subr.mxu0 0.0
  %195 = vmatpush1.msra.mxu0 0.0
  %196 = vmatprep.subr.mxu0 0.0
  %197 = vmatpush1.msra.mxu0 0.0
  %198 = vmatprep.subr.mxu0 0.0
  %199 = vmatpush1.msra.mxu0 0.0
  %200 = vmatprep.subr.mxu0 0.0
  %201 = vmatpush1.msra.mxu0 0.0
  %202 = vmatprep.subr.mxu0 0.0
  %203 = vmatpush1.msra.mxu0 0.0
  %204 = vmatprep.subr.mxu0 0.0
  %205 = vmatpush1.msra.mxu0 0.0
  %206 = vmatprep.subr.mxu0 0.0
  %207 = vmatpush1.msra.mxu0 0.0
  %208 = vmatprep.subr.mxu0 0.0
  %209 = vmatpush1.msra.mxu0 0.0
  %210 = vmatprep.subr.mxu0 0.0
  %211 = vmatpush1.msra.mxu0 0.0
  %212 = vmatprep.subr.mxu0 0.0
  %213 = vmatpush1.msra.mxu0 0.0
  %214 = vmatprep.subr.mxu0 0.0
  %215 = vmatpush1.msra.mxu0 0.0
  %216 = vmatprep.subr.mxu0 0.0
  %217 = vmatpush1.msra.mxu0 0.0
  %218 = vmatprep.subr.mxu0 0.0
  %219 = vmatpush1.msra.mxu0 0.0
  %220 = vmatprep.subr.mxu0 0.0
  %221 = vmatpush1.msra.mxu0 0.0
  %222 = vmatprep.subr.mxu0 0.0
  %223 = vmatpush1.msra.mxu0 0.0
  %224 = vmatprep.subr.mxu0 0.0
  %225 = vmatpush1.msra.mxu0 0.0
  %226 = vmatprep.subr.mxu0 0.0
  %227 = vmatpush1.msra.mxu0 0.0
  %228 = vmatprep.mubr.f32.mxu0 0.0
  %229 = vmatmul.mubr.f32.gmra.mrb[0].mxu0 %v59
  %v230 = vpop.f32.mrb[0].mxu0
  %v231 = vadd.f32 %v53, %v230
  %v232 = vpop.f32.mrb[0].mxu0
  %v233 = vadd.f32 %v53, %v232
  %234 = vdwg.mxu0
  %v235 = vmax.f32 %v231, 0.0
  %v236 = vmax.f32 %v233, 0.0
  %v237 = vmin.f32 %v235, 6.0
  %v238 = vmin.f32 %v236, 6.0
  %s239 = scalar_lea.vmem %s3, 8
  %v240 = vld [vmem:[%s239] sm:$0xff]
  %v241 = vadd.f32 %v237, %v238
  %242 = vadd.xlane.f32.xlu0 %v241
  %v243 = vpop.xlane.xlu0 %242
  %v244 = vadd.f32 %v240, %v243
  %245 = vst.msk [vmem:[%s239] sm:$0xff] %vm146, %v244
  %s246 = scalar_lea.vmem %s4, 8
  %v247 = vld [vmem:[%s246] sm:$0xff]
  %v248 = vmul.f32 %v237, %v237
  %v249 = vmul.f32 %v238, %v238
  %v250 = vadd.f32 %v248, %v249
  %251 = vadd.xlane.f32.xlu0 %v250
  %v252 = vpop.xlane.xlu0 %251
  %v253 = vadd.f32 %v247, %v252
  %254 = vst.msk [vmem:[%s246] sm:$0xff] %vm146, %v253
  // Predicated region
  $region18: #{tpu_custom_call.1} parent=0 // pred_check
    _
  $region19: #{tpu_custom_call.1} parent=0 // pred_check_branch
    %256 = sbr.rel (0) target = $region21
  $region20: #{tpu_custom_call.1} parent=0 // pred_region
    _
  $region21: #{tpu_custom_call.1} parent=0 // pred_fallthru
    _
  // Predicated region
  $region22: #{tpu_custom_call.1} parent=0 // pred_check
    _
  $region23: #{tpu_custom_call.1} parent=0 // pred_check_branch
    %258 = sbr.rel (0) target = $region25
  $region24: #{tpu_custom_call.1} parent=0 // pred_region
    _
  $region25: #{tpu_custom_call.1} parent=0 // pred_fallthru
    _
  // Predicated region
  $region26: #{tpu_custom_call.1} parent=0 // pred_check
    _
  $region27: #{tpu_custom_call.1} parent=0 // pred_check_branch
    %260 = sbr.rel (0) target = $region29
  $region28: #{tpu_custom_call.1} parent=0 // pred_region
    _
  $region29: #{tpu_custom_call.1} parent=0 // pred_fallthru
    _
  // Predicated region
  $region30: #{tpu_custom_call.1} parent=0 // pred_check
    _
  $region31: #{tpu_custom_call.1} parent=0 // pred_check_branch
    %262 = sbr.rel (0) target = $region33
  $region32: #{tpu_custom_call.1} parent=0 // pred_region
    _
  $region33: #{tpu_custom_call.1} parent=0 // pred_fallthru
    _

</llo_original>
